<compile_context>
chip_gen: v6e
topology: v6e:2x2x1
jax: 0.10.0
libtpu: 0.0.40
codegen_flags: <defaults>
</compile_context>

<pallas_src>
import math

import jax
import jax.numpy as jnp
from jax.experimental import pallas as pl
from jax.experimental.pallas import tpu as pltpu


# ---------------------------------------------------------------------------
# Kernels
# ---------------------------------------------------------------------------

def _make_mask_kernel(logit_p, temp, eps):
    """Prologue kernel: concrete_noise = sigmoid((logit_p + log(n) - log1p(-n)) / temp)."""
    logit_p_over_temp = float(logit_p) / float(temp)
    inv_temp = 1.0 / float(temp)

    def mask_kernel(noise_ref, mask_ref):
        noise = jnp.clip(noise_ref[...].astype(jnp.float32), eps, 1.0 - eps)
        logits = logit_p_over_temp + inv_temp * (jnp.log(noise) - jnp.log1p(-noise))
        mask_ref[...] = jax.nn.sigmoid(logits).astype(mask_ref.dtype)

    return mask_kernel


def _mul_kernel(mask_ref, x_ref, out_ref):
    """Streaming kernel: pure broadcast-multiply, in the input dtype."""
    # mask_ref: (R, C) in x.dtype (same block every grid step; DMA skipped after step 0)
    # x_ref / out_ref: (TN, R, C)
    out_ref[...] = (x_ref[...] * mask_ref[...][None, :, :]).astype(out_ref.dtype)


# ---------------------------------------------------------------------------
# Wrapper
# ---------------------------------------------------------------------------

def _vmem_capacity_bytes():
    try:
        return int(pltpu.get_tpu_info().vmem_capacity_bytes)
    except Exception:
        return 128 * 1024 * 1024  # conservative v5e/v6e default


def cdropout_forward(x, noise, logit_p, temp, *, eps=1e-6, target_tile_bytes=8 << 20):
    """Concrete dropout forward.

    x:     (..., R, C) array; the mask broadcasts over all leading dims.
    noise: (R, C) uniform(0,1) noise buffer (matches PyTorch `self.noise`).
    logit_p, temp: python floats (folded as compile-time constants).
    """
    orig_shape = x.shape
    R, C = x.shape[-2], x.shape[-1]
    assert noise.shape == (R, C), "noise must match x.shape[-2:]"
    x3 = x.reshape(-1, R, C)
    N = x3.shape[0]

    # --- prologue: compute the (R, C) concrete mask once (EUP work out of the hot loop) ---
    mask = pl.pallas_call(
        _make_mask_kernel(logit_p, temp, eps),
        out_shape=jax.ShapeDtypeStruct((R, C), x.dtype),
    )(noise)

    # --- generation-aware tiling / VMEM budget ---
    vmem_cap = _vmem_capacity_bytes()
    # peak VMEM ~= 2x in-tile + 2x out-tile (double buffering) + mask; leave headroom.
    vmem_limit = int(min(48 << 20, (vmem_cap * 7) // 10))

    bytes_per_slice = R * C * jnp.dtype(x.dtype).itemsize
    tn = int(max(1, min(N, target_tile_bytes // max(1, bytes_per_slice))))
    if N > 1:
        # Guarantee >=2 grid steps so the 'parallel' axis spans both TCs on v7x.
        tn = min(tn, pl.cdiv(N, 2))
    grid = (pl.cdiv(N, tn),)

    # TODO(synk): if real workloads have C that is not a multiple of 128, flatten the mask
    # dims (x -> (N, R*C), mask -> (R*C,)) in this wrapper so output stores stay lane-dense.

    grid_spec = pltpu.PrefetchScalarGridSpec(
        num_scalar_prefetch=0,
        grid=grid,
        in_specs=[
            pl.BlockSpec((R, C), lambda i: (0, 0)),          # shared mask block
            pl.BlockSpec((tn, R, C), lambda i: (i, 0, 0)),   # TN x-slices per grid step
        ],
        out_specs=pl.BlockSpec((tn, R, C), lambda i: (i, 0, 0)),
    )

    out3 = pl.pallas_call(
        _mul_kernel,
        out_shape=jax.ShapeDtypeStruct((N, R, C), x.dtype),
        grid_spec=grid_spec,
        compiler_params=pltpu.CompilerParams(
            dimension_semantics=("parallel",),   # megacore-safe: no cross-step state
            vmem_limit_bytes=vmem_limit,
        ),
    )(mask, x3)

    return out3.reshape(orig_shape)


def cdropout_reference(x, noise, logit_p, temp):
    concrete_p = logit_p + jnp.log(noise) - jnp.log1p(-noise)
    concrete_noise = jax.nn.sigmoid(concrete_p / temp)
    return x * concrete_noise  # mask broadcasts over leading dims


# ---------------------------------------------------------------------------
# Example / self-test
# ---------------------------------------------------------------------------

if __name__ == "__main__":
    key = jax.random.PRNGKey(0)

    # Module init (deterministic, matches CDropout.__init__ defaults):
    rate = 0.5
    temperature = 0.1
    logit_p = -math.log(1.0 / (1.0 - rate) - 1.0)   # = 0.0 for rate=0.5

    # Small shapes: N=5 particles (NOT divisible by tn -> partial edge block is exercised),
    # mask over (R, C) = (8, 128): lane-dense, unmasked vector stores.
    N, R, C = 5, 8, 128
    kx, kn = jax.random.split(key)
    x = jax.random.normal(kx, (N, R, C), dtype=jnp.float32)
    # noise buffer = torch.rand_like(sample) (uniform in (0,1))
    noise = jax.random.uniform(kn, (R, C), dtype=jnp.float32,
                               minval=1e-6, maxval=1.0 - 1e-6)

    # f32 path
    out = jax.block_until_ready(cdropout_forward(x, noise, logit_p, temperature))
    ref = cdropout_reference(x, noise, logit_p, temperature)
    assert out.shape == x.shape and out.dtype == x.dtype
    assert jnp.allclose(out, ref, atol=1e-5, rtol=1e-5), "f32 mismatch vs reference"

    # bf16 path (mask cast once; multiply runs natively in bf16 on v6e/v7x)
    xb = x.astype(jnp.bfloat16)
    outb = jax.block_until_ready(cdropout_forward(xb, noise, logit_p, temperature))
    assert outb.shape == xb.shape and outb.dtype == jnp.bfloat16
    assert jnp.allclose(outb.astype(jnp.float32), ref, atol=3e-2, rtol=3e-2), \
        "bf16 mismatch vs reference"

    # TODO(synk): PyTorch buffer mutation side-effects (self.noise / self.concrete_noise /
    # self.p updates) and the weights/biases regularizers are module state / training-loss
    # terms; the kernel is purely functional and returns the forward output only.
    print("KERNEL_OK")
</pallas_src>

<mosaic_0001>
module attributes {stable_mosaic.version = 11 : i64} {
  func.func @mask_kernel(%arg0: memref<8x128xf32, #tpu.memory_space<vmem>>, %arg1: memref<8x128xf32, #tpu.memory_space<vmem>>) attributes {dimension_semantics = [], scalar_prefetch = 0 : i64, scratch_operands = 0 : i64, tpu.core_type = #tpu.core_type<tc>} {
    %c0 = arith.constant 0 : index
    %c0_0 = arith.constant 0 : index
    %0 = vector.load %arg0[%c0, %c0_0] : memref<8x128xf32, #tpu.memory_space<vmem>>, vector<8x128xf32>
    %cst = arith.constant 9.99999997E-7 : f32
    %cst_1 = arith.constant 0.999998986 : f32
    %1 = vector.broadcast %cst : f32 to vector<8x128xf32>
    %2 = arith.maximumf %1, %0 : vector<8x128xf32>
    %3 = vector.broadcast %cst_1 : f32 to vector<8x128xf32>
    %4 = arith.minimumf %3, %2 : vector<8x128xf32>
    %5 = math.log %4 : vector<8x128xf32>
    %cst_2 = arith.constant 0.000000e+00 : f32
    %6 = vector.broadcast %cst_2 : f32 to vector<8x128xf32>
    %7 = arith.subf %6, %4 : vector<8x128xf32>
    %8 = math.log1p %7 : vector<8x128xf32>
    %9 = arith.subf %5, %8 : vector<8x128xf32>
    %cst_3 = arith.constant 1.000000e+01 : f32
    %10 = vector.broadcast %cst_3 : f32 to vector<8x128xf32>
    %11 = arith.mulf %10, %9 : vector<8x128xf32>
    %cst_4 = arith.constant -0.000000e+00 : f32
    %12 = vector.broadcast %cst_4 : f32 to vector<8x128xf32>
    %13 = arith.addf %12, %11 : vector<8x128xf32>
    %14 = arith.negf %13 : vector<8x128xf32>
    %15 = math.exp %14 : vector<8x128xf32>
    %cst_5 = arith.constant 1.000000e+00 : f32
    %16 = vector.broadcast %cst_5 : f32 to vector<8x128xf32>
    %17 = arith.addf %16, %15 : vector<8x128xf32>
    %18 = arith.divf %16, %17 : vector<8x128xf32>
    %c0_6 = arith.constant 0 : index
    %c0_7 = arith.constant 0 : index
    %19 = vector.load %arg1[%c0_6, %c0_7] : memref<8x128xf32, #tpu.memory_space<vmem>>, vector<8x128xf32>
    tpu.vector_store %arg1[%c0_6, %c0_7], %18 {strides = array<i32>} : memref<8x128xf32, #tpu.memory_space<vmem>>, vector<8x128xf32>,
    return
  }
}

</mosaic_0001>

<llo_original>
// kernel: tpu_custom_call.1
$region0: #{tpu_custom_call.1}
  #allocation0 [shape = 'u32[]', space=smem, size = 0x4, offset = 0x4, fixed_abs, tag = 'smem constant byte address 0x4 - core index']
  #allocation1 [shape = 'u32[144,128]{1,0:T(1,128)}', space=vmem, size = 0x12000, scoped, tag = 'internal scratch']
  %s0 = inlined_call_operand.hbm [shape: f32[8,128], index: 0, kind: input, shape index: {}]
  %s1 = inlined_call_operand.hbm [shape: f32[8,128], index: 1, kind: output, shape index: {}]
  %s2 = sld [smem:[#allocation0]]
  $region18: #{tpu_custom_call.1} parent=0
    _
  %s4 = ssub.s32 1, %s2
  %s5 = scalar_select 0, %s4, %s2
  $region1: #{tpu_custom_call.1} parent=0
    #allocation2 [shape = 'u8[4096]{0}', space=vmem, size = 0x1000, scoped, tag = 'input window, operand 0, single buffered']
    #allocation3 [shape = 's32[1]{0}', space=sflag, size = 0x4, scoped, tag = 'scoped memory for tpu_custom_call.1']
    #allocation4 [shape = 's32[1]{0}', space=sflag, size = 0x4, scoped, tag = 'scoped memory for tpu_custom_call.1']
    #allocation5 [shape = 'u8[4096]{0}', space=vmem, size = 0x1000, scoped, tag = 'output window, operand 0, single buffered']
    %6 = vsyncpa [#allocation3], 0
    %7 = vsyncpa [#allocation4], 0
    // Predicated region
    $region2: #{tpu_custom_call.1} parent=1 // pred_check
      _
    $region3: #{tpu_custom_call.1} parent=1 // pred_check_branch
      %9 = sbr.rel (0) target = $region5
    $region4: #{tpu_custom_call.1} parent=1 // pred_region
      %s11 = ssub.s32 128, 128
      %12 = vsyncadd [#allocation3], %s11
      %s14 = sshll.u32 [#allocation2], 4
      %s15 = int_to_ptr.vmem [resolvable:$true] %s14
      %17 = dma.hbm_to_vmem [thread:$0]  %s0, 128, %s15, [#allocation3]
    $region5: #{tpu_custom_call.1} parent=1 // pred_fallthru
      _
    // Predicated region
    $region6: #{tpu_custom_call.1} parent=1 // pred_check
      _
    $region7: #{tpu_custom_call.1} parent=1 // pred_check_branch
      %19 = sbr.rel (0) target = $region9
    $region8: #{tpu_custom_call.1} parent=1 // pred_region
      %20 = dma.done [#allocation3], 128
    $region9: #{tpu_custom_call.1} parent=1 // pred_fallthru
      _
    %v21 = vld [vmem:[#allocation2] sm:$0xff]
    %v22 = vmax.f32 %v21, 1e-06
    %v23 = vmin.f32 %v22, 0.999999
    %v24 = vlog2.pop %v23
    %v25 = vmul.f32 %v24, 0.6931472
    %v26 = vsub.f32 0.0, %v23
    %v27 = vadd.f32 %v26, 1.0
    %v28 = vlog2.pop %v27
    %v29 = vmul.f32 %v28, 0.6931472
    %v30 = vmul.f32 -0.5, %v26
    %v31 = vadd.f32 %v30, 1.0
    %v32 = vmul.f32 %v31, %v26
    %v33 = vand.u32 2147483647, %v26
    %vm34 = vcmp.lt.f32.partialorder %v33, 0.0004427343
    %v35 = vsel %vm34, %v32, %v29
    %v36 = vsub.f32 %v25, %v35
    %v37 = vmul.f32 %v36, 10.0
    %v38 = vxor.u32 %v37, 2147483648
    %v39 = vmul.f32 %v38, 1.442695
    %v40 = vpow.pop %v39
    %v41 = vadd.f32 %v40, 1.0
    %v42 = vrcp.pop %v41
    %v43 = vmul.f32 1.0, %v42
    %44 = vst [vmem:[#allocation5] sm:$0xff] %v43
    // Predicated region
    $region10: #{tpu_custom_call.1} parent=1 // pred_check
      _
    $region11: #{tpu_custom_call.1} parent=1 // pred_check_branch
      %46 = sbr.rel (0) target = $region13
    $region12: #{tpu_custom_call.1} parent=1 // pred_region
      %s48 = ssub.s32 128, 128
      %49 = vsyncadd [#allocation4], %s48
      %s51 = sshll.u32 [#allocation5], 4
      %s52 = int_to_ptr.vmem [resolvable:$true] %s51
      %54 = dma.vmem_to_hbm [thread:$0]  %s52, 128, %s1, [#allocation4]
    $region13: #{tpu_custom_call.1} parent=1 // pred_fallthru
      _
    // Predicated region
    $region14: #{tpu_custom_call.1} parent=1 // pred_check
      _
    $region15: #{tpu_custom_call.1} parent=1 // pred_check_branch
      %56 = sbr.rel (0) target = $region17
    $region16: #{tpu_custom_call.1} parent=1 // pred_region
      %57 = dma.done [#allocation4], 128
    $region17: #{tpu_custom_call.1} parent=1 // pred_fallthru
      _
    %58 = vsyncpa [#allocation3], 1
    %59 = vsyncpa [#allocation4], 1

</llo_original>
